<compile_context>
chip_gen: v5e
topology: v5e:2x2
jax: 0.10.0
libtpu: 0.0.40
codegen_flags: <defaults>
</compile_context>

<pallas_src>
import functools

import jax
import jax.numpy as jnp
from jax.experimental import pallas as pl
from jax.experimental.pallas import tpu as pltpu

IGNORE_INDEX = 255


def _ce2d_kernel(logits_ref, tgt_ref, out_ref, *, ignore_index, hw, tile_p):
    """Per-tile partial NLL sum and valid-pixel count (merged output).

    logits_ref : (C, TP) float        logits (classes on sublanes, pixels on lanes)
    tgt_ref    : (1, TP) uint8/int32  target class per pixel
    out_ref    : (1, 1, 1, 2) f32     [partial NLL sum, partial valid count]
    """
    j = pl.program_id(1)

    x = logits_ref[...].astype(jnp.float32)                     # (C, TP)
    tgt = tgt_ref[...].astype(jnp.int32)                        # (1, TP)

    # Numerically stable log-sum-exp over the class (sublane) axis, per pixel.
    m = jnp.max(x, axis=0, keepdims=True)                       # (1, TP)
    lse = jnp.log(jnp.sum(jnp.exp(x - m), axis=0, keepdims=True)) + m

    # Gather x[target] with a one-hot compare (no dynamic gather on vregs);
    # never materialize the full logp tile: picked_logp = picked_x - lse.
    # TODO(synk): if bundle profiling shows XLU saturation at small C, offload
    # the two class-axis sums to the otherwise-idle MXU (ones(1,C) @ (C,TP)).
    class_iota = jax.lax.broadcasted_iota(jnp.int32, x.shape, 0)   # (C, TP)
    picked_x = jnp.sum(jnp.where(class_iota == tgt, x, 0.0),
                       axis=0, keepdims=True)                      # (1, TP)
    nll = lse - picked_x                                        # -log p(target)

    # Mask ignored pixels and the out-of-bounds tail of the last ragged tile
    # (tail lanes read unspecified VMEM; garbage is lane-local and masked).
    col = jax.lax.broadcasted_iota(jnp.int32, tgt.shape, 1)        # (1, TP)
    in_range = (j * tile_p + col) < hw
    valid = (tgt != ignore_index) & in_range

    part_sum = jnp.sum(jnp.where(valid, nll, 0.0))
    part_cnt = jnp.sum(valid.astype(jnp.float32))

    # Single merged store: lane 0 = sum, lane 1 = count.
    lane = jax.lax.broadcasted_iota(jnp.int32, (1, 1, 1, 2), 3)
    out_ref[...] = jnp.where(lane == 0, part_sum, part_cnt)


def cross_entropy_loss_2d(logits_nchw, targets_nhw, *,
                          ignore_index=IGNORE_INDEX,
                          block_byte_budget=4 << 20,    # streamed logits bytes / block
                          f32_work_budget=16 << 20):    # in-kernel f32 temporaries
    """Equivalent of CrossEntropyLoss2d()(inputs, targets).

    logits_nchw : (N, C, H, W) float (f32 or bf16; streamed as-is, upcast in-kernel)
    targets_nhw : (N, H, W)    int class indices (or ignore_index)
    returns scalar f32: mean over non-ignored pixels of -log_softmax(logits)[target]
    """
    N, C, H, W = logits_nchw.shape
    HW = H * W
    itemsize = jnp.dtype(logits_nchw.dtype).itemsize

    # Pixel tile: multiple of 128 lanes.  Sized from (a) the dtype-aware HBM
    # block budget and (b) the f32 temporary budget (x upcast / exp / iota /
    # select ~= 4 f32 blocks), so big-tile streaming pays off on v5e/v6e and
    # still fits v7x's 64 MiB VMEM.  The 128-lane floor can exceed the budget
    # for extremely large C; unavoidable.
    hw_padded = ((HW + 127) // 128) * 128
    tp_by_dma = block_byte_budget // (C * itemsize)
    tp_by_work = f32_work_budget // (C * 4 * 4)
    tp = min(tp_by_dma, tp_by_work, hw_padded)
    tp = max(128, (tp // 128) * 128)
    num_tiles = (HW + tp - 1) // tp

    # Targets as uint8 (ignore_index=255 fits) when possible: 4x smaller
    # target stream.
    tgt_dtype = jnp.uint8 if C <= 255 else jnp.int32

    # Free reshapes only: no NCHW->NHWC transpose, no HBM-side padding.
    x = logits_nchw.reshape(N, C, HW)
    t = targets_nhw.reshape(N, 1, HW).astype(tgt_dtype)

    block_bytes = C * tp * itemsize
    tgt_block_bytes = tp * jnp.dtype(tgt_dtype).itemsize

    # Explicit scoped-VMEM limit: double-buffered inputs + f32 temporaries +
    # headroom.  Needed to raise v5e's 16 MiB default; capped comfortably
    # under v7x's 64 MiB physical VMEM per TensorCore.
    vmem_limit = int(2 * (block_bytes + tgt_block_bytes) + 4 * C * tp * 4 + (8 << 20))
    vmem_limit = max(32 << 20, min(vmem_limit, 56 << 20))

    logits_idx = lambda n, j: (n, 0, j)
    if num_tiles >= 4 and block_bytes < (1 << 20):
        # Small blocks + many steps: deepen buffering to hide DMA issue latency.
        logits_spec = pl.BlockSpec((pl.Squeezed(), C, tp), logits_idx,
                                   pipeline_mode=pl.Buffered(3))
    else:
        logits_spec = pl.BlockSpec((pl.Squeezed(), C, tp), logits_idx)

    kernel = functools.partial(_ce2d_kernel, ignore_index=ignore_index,
                               hw=HW, tile_p=tp)

    parts = pl.pallas_call(
        kernel,
        out_shape=jax.ShapeDtypeStruct((N, num_tiles, 1, 2), jnp.float32),
        grid_spec=pltpu.PrefetchScalarGridSpec(
            num_scalar_prefetch=0,
            grid=(N, num_tiles),
            in_specs=[
                logits_spec,
                pl.BlockSpec((pl.Squeezed(), 1, tp), lambda n, j: (n, 0, j)),
            ],
            out_specs=pl.BlockSpec((1, 1, 1, 2), lambda n, j: (n, j, 0, 0)),
        ),
        compiler_params=pltpu.CompilerParams(
            dimension_semantics=("parallel", "parallel"),
            vmem_limit_bytes=vmem_limit),
    )(x, t)

    # size_average=True with weight=None -> mean over non-ignored pixels.
    # (All pixels ignored -> 0/0 = NaN, matching PyTorch's size_average.)
    # TODO(synk): out-of-range targets (t >= C, t != ignore_index) silently add
    # lse to the loss instead of raising like PyTorch.
    return jnp.sum(parts[..., 0]) / jnp.sum(parts[..., 1])


def _reference(logits_nchw, targets_nhw, ignore_index=IGNORE_INDEX):
    logp = jax.nn.log_softmax(logits_nchw.astype(jnp.float32), axis=1)
    t = targets_nhw.astype(jnp.int32)
    valid = t != ignore_index
    t_safe = jnp.where(valid, t, 0)
    picked = jnp.take_along_axis(logp, t_safe[:, None, :, :], axis=1)[:, 0]
    nll = jnp.where(valid, -picked, 0.0)
    return jnp.sum(nll) / jnp.sum(valid.astype(jnp.float32))


if __name__ == "__main__":
    key = jax.random.PRNGKey(0)
    k_x, k_t = jax.random.split(key)

    N, C, H, W = 2, 4, 16, 16
    x = jax.random.normal(k_x, (N, C, H, W), dtype=jnp.float32)
    targets = jax.random.randint(k_t, (N, H, W), 0, C, dtype=jnp.int32)
    # Deterministically mark a few pixels as ignored to exercise ignore_index.
    targets = targets.at[0, 0, :5].set(IGNORE_INDEX)
    targets = targets.at[1, 7, 3:9].set(IGNORE_INDEX)

    loss = jax.block_until_ready(cross_entropy_loss_2d(x, targets))
    ref = jax.block_until_ready(_reference(x, targets))
    assert jnp.allclose(loss, ref, rtol=1e-5, atol=1e-5), (loss, ref)

    print("KERNEL_OK")
</pallas_src>

<mosaic_0001>
module attributes {stable_mosaic.version = 11 : i64} {
  func.func @_ce2d_kernel(%arg0: i32, %arg1: i32, %arg2: memref<1x4x256xf32, #tpu.memory_space<vmem>>, %arg3: memref<1x1x256xi8, #tpu.memory_space<vmem>>, %arg4: memref<1x1x1x2xf32, #tpu.memory_space<vmem>>) attributes {dimension_semantics = [#tpu.dimension_semantics<parallel>, #tpu.dimension_semantics<parallel>], iteration_bounds = array<i64: 2, 1>, scalar_prefetch = 0 : i64, scratch_operands = 0 : i64, tpu.core_type = #tpu.core_type<tc>, window_params = [{transform_indices = @transform_0, window_bounds = array<i64: 1, 4, 256>}, {transform_indices = @transform_1, window_bounds = array<i64: 1, 1, 256>}, {transform_indices = @transform_2, window_bounds = array<i64: 1, 1, 1, 2>}]} {
    %c0 = arith.constant 0 : index
    %c0_0 = arith.constant 0 : index
    %c0_1 = arith.constant 0 : index
    %0 = vector.load %arg2[%c0, %c0_0, %c0_1] : memref<1x4x256xf32, #tpu.memory_space<vmem>>, vector<1x4x256xf32>
    %1 = vector.shape_cast %0 : vector<1x4x256xf32> to vector<4x256xf32>
    %c0_2 = arith.constant 0 : index
    %c0_3 = arith.constant 0 : index
    %c0_4 = arith.constant 0 : index
    %2 = vector.load %arg3[%c0_2, %c0_3, %c0_4] : memref<1x1x256xi8, #tpu.memory_space<vmem>>, vector<1x1x256xi8>
    %3 = vector.shape_cast %2 : vector<1x1x256xi8> to vector<1x256xi8>
    %4 = arith.extui %3 : vector<1x256xi8> to vector<1x256xi32>
    %cst = arith.constant dense<0xFF800000> : vector<256xf32>
    %5 = vector.multi_reduction <maximumf>, %1, %cst [0] : vector<4x256xf32> to vector<256xf32>
    %6 = vector.shape_cast %5 : vector<256xf32> to vector<1x256xf32>
    %7 = vector.broadcast %6 : vector<1x256xf32> to vector<4x256xf32>
    %8 = arith.subf %1, %7 : vector<4x256xf32>
    %9 = math.exp %8 : vector<4x256xf32>
    %cst_5 = arith.constant dense<0.000000e+00> : vector<256xf32>
    %10 = vector.multi_reduction <add>, %9, %cst_5 [0] : vector<4x256xf32> to vector<256xf32>
    %11 = vector.shape_cast %10 : vector<256xf32> to vector<1x256xf32>
    %12 = math.log %11 : vector<1x256xf32>
    %13 = arith.addf %12, %6 : vector<1x256xf32>
    %14 = tpu.iota {dimensions = array<i32: 0>} : vector<4x256xi32>
    %15 = vector.broadcast %4 : vector<1x256xi32> to vector<4x256xi32>
    %16 = arith.cmpi eq, %14, %15 : vector<4x256xi32>
    %cst_6 = arith.constant 0.000000e+00 : f32
    %17 = vector.broadcast %cst_6 : f32 to vector<4x256xf32>
    %18 = arith.select %16, %1, %17 : vector<4x256xi1>, vector<4x256xf32>
    %cst_7 = arith.constant dense<0.000000e+00> : vector<256xf32>
    %19 = vector.multi_reduction <add>, %18, %cst_7 [0] : vector<4x256xf32> to vector<256xf32>
    %20 = vector.shape_cast %19 : vector<256xf32> to vector<1x256xf32>
    %21 = arith.subf %13, %20 : vector<1x256xf32>
    %22 = tpu.iota {dimensions = array<i32: 1>} : vector<1x256xi32>
    %c256_i32 = arith.constant 256 : i32
    %23 = arith.muli %arg1, %c256_i32 : i32
    %24 = vector.broadcast %23 : i32 to vector<1x256xi32>
    %25 = arith.addi %24, %22 : vector<1x256xi32>
    %c256_i32_8 = arith.constant 256 : i32
    %26 = vector.broadcast %c256_i32_8 : i32 to vector<1x256xi32>
    %27 = arith.cmpi slt, %25, %26 : vector<1x256xi32>
    %c255_i32 = arith.constant 255 : i32
    %28 = vector.broadcast %c255_i32 : i32 to vector<1x256xi32>
    %29 = arith.cmpi ne, %4, %28 : vector<1x256xi32>
    %30 = arith.andi %29, %27 : vector<1x256xi1>
    %cst_9 = arith.constant 0.000000e+00 : f32
    %31 = vector.broadcast %cst_9 : f32 to vector<1x256xf32>
    %32 = arith.select %30, %21, %31 : vector<1x256xi1>, vector<1x256xf32>
    %33 = vector.shape_cast %32 : vector<1x256xf32> to vector<1x1x256xf32>
    %cst_10 = arith.constant dense<0.000000e+00> : vector<1xf32>
    %34 = vector.multi_reduction <add>, %33, %cst_10 [1, 2] : vector<1x1x256xf32> to vector<1xf32>
    %35 = vector.shape_cast %34 : vector<1xf32> to vector<1x1x1xf32>
    %36 = vector.extract %35[0, 0, 0] : f32 from vector<1x1x1xf32>
    %37 = arith.extui %30 : vector<1x256xi1> to vector<1x256xi32>
    %38 = arith.sitofp %37 : vector<1x256xi32> to vector<1x256xf32>
    %39 = vector.shape_cast %38 : vector<1x256xf32> to vector<1x1x256xf32>
    %cst_11 = arith.constant dense<0.000000e+00> : vector<1xf32>
    %40 = vector.multi_reduction <add>, %39, %cst_11 [1, 2] : vector<1x1x256xf32> to vector<1xf32>
    %41 = vector.shape_cast %40 : vector<1xf32> to vector<1x1x1xf32>
    %42 = vector.extract %41[0, 0, 0] : f32 from vector<1x1x1xf32>
    %43 = tpu.iota {dimensions = array<i32: 3>} : vector<1x1x1x2xi32>
    %c0_i32 = arith.constant 0 : i32
    %44 = vector.broadcast %c0_i32 : i32 to vector<1x1x1x2xi32>
    %45 = arith.cmpi eq, %43, %44 : vector<1x1x1x2xi32>
    %46 = vector.broadcast %36 : f32 to vector<1x1x1x2xf32>
    %47 = vector.broadcast %42 : f32 to vector<1x1x1x2xf32>
    %48 = arith.select %45, %46, %47 : vector<1x1x1x2xi1>, vector<1x1x1x2xf32>
    %c0_12 = arith.constant 0 : index
    %c0_13 = arith.constant 0 : index
    %c0_14 = arith.constant 0 : index
    %c0_15 = arith.constant 0 : index
    %49 = vector.load %arg4[%c0_12, %c0_13, %c0_14, %c0_15] : memref<1x1x1x2xf32, #tpu.memory_space<vmem>>, vector<1x1x1x2xf32>
    tpu.vector_store %arg4[%c0_12, %c0_13, %c0_14, %c0_15], %48 {strides = array<i32>} : memref<1x1x1x2xf32, #tpu.memory_space<vmem>>, vector<1x1x1x2xf32>,
    return
  }
  func.func @transform_0(%arg0: i32, %arg1: i32) -> (i32, i32, i32) {
    %c0_i32 = arith.constant 0 : i32
    %c0_i32_0 = arith.constant 0 : i32
    return %arg0, %c0_i32, %arg1 : i32, i32, i32
  }
  func.func @transform_1(%arg0: i32, %arg1: i32) -> (i32, i32, i32) {
    %c0_i32 = arith.constant 0 : i32
    %c0_i32_0 = arith.constant 0 : i32
    return %arg0, %c0_i32, %arg1 : i32, i32, i32
  }
  func.func @transform_2(%arg0: i32, %arg1: i32) -> (i32, i32, i32, i32) {
    %c0_i32 = arith.constant 0 : i32
    %c0_i32_0 = arith.constant 0 : i32
    %c0_i32_1 = arith.constant 0 : i32
    return %arg0, %arg1, %c0_i32, %c0_i32_0 : i32, i32, i32, i32
  }
}

</mosaic_0001>

<llo_original>
// kernel: tpu_custom_call.1
$region0: #{tpu_custom_call.1}
  #allocation0 [shape = 'u32[]', space=smem, size = 0x4, offset = 0x4, fixed_abs, tag = 'smem constant byte address 0x4 - core index']
  #allocation1 [shape = 'u32[72,128]{1,0:T(1,128)}', space=vmem, size = 0x9000, scoped, tag = 'internal scratch']
  %s0 = inlined_call_operand.hbm [shape: f32[2,4,256], index: 0, kind: input, shape index: {}]
  %s1 = inlined_call_operand.vmem [shape: u8[2,1,256], index: 1, kind: input, shape index: {}]
  %s2 = inlined_call_operand.hbm [shape: f32[2,1,1,2], index: 2, kind: output, shape index: {}]
  %s3 = sld [smem:[#allocation0]]
  $region45: #{tpu_custom_call.1} parent=0
    _
  %s5 = ssub.s32 1, %s3
  %s6 = scalar_select 0, %s5, %s3
  $region1: #{tpu_custom_call.1} parent=0
    #allocation2 [shape = 'u8[8192]{0}', space=vmem, size = 0x2000, scoped, tag = 'input window, operand 0']
    #allocation3 [shape = 's32[2]{0}', space=sflag, size = 0x8, scoped, tag = 'scoped memory for tpu_custom_call.1']
    #allocation4 [shape = 's32[2]{0}', space=sflag, size = 0x8, scoped, tag = 'scoped memory for tpu_custom_call.1']
    #allocation5 [shape = 'u8[1024]{0}', space=vmem, size = 0x400, scoped, tag = 'output window, operand 0']
    %7 = vsyncpa [#allocation3], 0
    %s8 = scalar_lea.sflag [#allocation3], 1
    %9 = vsyncpa %s8, 0
    %10 = vsyncpa [#allocation4], 0
    %s11 = scalar_lea.sflag [#allocation4], 1
    %12 = vsyncpa %s11, 0
    loop: start=0, step=1, limit=4
    $region2: #{tpu_custom_call.1} parent=1 // loop_pre_header
      _
    $region3: #{tpu_custom_call.1} parent=1 // loop_header
      %s14 = sphi 0, %s18
      %p15 = scmp.ge.s32.totalorder %s14, 4
      %s21 = sphi 0, %s33
      %s22 = sphi 0, %s29
      %s23 = sphi 0, %s21
      %s24 = sphi 0, %s22
      %s25 = sphi 0, %s23
      %s26 = sphi 0, %s24
      %s38 = sphi 0, %s40
      %s41 = sphi 0, %s38
      %s42 = sphi 0, %s41
      %s58 = sphi 0, %s42
      %s66 = sphi 0, %s68
      %s69 = sphi 0, %s66
      %s70 = sphi 0, %s69
      %s86 = sphi 0, %s70
      %s94 = sphi 0, %s96
      %s97 = sphi 0, %s94
      %s98 = sphi 0, %s97
      %s114 = sphi 0, %s98
    $region4: #{tpu_custom_call.1} parent=1 // loop_header_branch
      %17 = sbr.rel (%p15) target = $region8
    $region5: #{tpu_custom_call.1} parent=1 // loop_body
      %s19 = ssub.s32 %s14, 1
      %s20 = ssub.s32 %s14, 2
      %s27 = sadd.s32 1, %s22
      %p28 = scmp.ge.s32.totalorder %s27, 1
      %s29 = scalar_select %p28, 0, %s27
      %s30 = sadd.s32 1, %s21
      %s31 = scalar_select %p28, %s30, %s21
      %p32 = scmp.ge.s32.totalorder %s31, 2
      %s33 = scalar_select %p32, 0, %s31
      %s34 = ssub.s32 %s21, %s33
      %s35 = ssub.s32 %s22, %s29
      %s36 = sor.u32 %s34, %s35
      %p37 = scmp.eq.s32.totalorder %s36, 0
      %s39 = sadd.s32 %s38, 1
      %s40 = scalar_select %p37, %s38, %s39
      %p43 = pneg %p37
      %p44 = scmp.eq.s32.totalorder %s14, 1
      %p45 = por %p43, %p44
      %p46 = scmp.ne.s32.totalorder %s38, %s41
      %p47 = scmp.eq.s32.totalorder %s14, 0
      %p48 = por %p46, %p47
      %p49 = scmp.ne.s32.totalorder %s38, %s41
      %p50 = scmp.eq.s32.totalorder %s19, 1
      %p51 = por %p49, %p50
      %p52 = scmp.ne.s32.totalorder %s41, %s42
      %p53 = scmp.eq.s32.totalorder %s19, 0
      %p54 = por %p52, %p53
      %p55 = scmp.ne.s32.totalorder %s41, %s42
      %p56 = scmp.eq.s32.totalorder %s20, 1
      %p57 = por %p55, %p56
      %p59 = scmp.ne.s32.totalorder %s42, %s58
      %p60 = scmp.eq.s32.totalorder %s20, 0
      %p61 = por %p59, %p60
      %s62 = ssub.s32 %s21, %s33
      %s63 = ssub.s32 %s22, %s29
      %s64 = sor.u32 %s62, %s63
      %p65 = scmp.eq.s32.totalorder %s64, 0
      %s67 = sadd.s32 %s66, 1
      %s68 = scalar_select %p65, %s66, %s67
      %p71 = pneg %p65
      %p72 = scmp.eq.s32.totalorder %s14, 1
      %p73 = por %p71, %p72
      %p74 = scmp.ne.s32.totalorder %s66, %s69
      %p75 = scmp.eq.s32.totalorder %s14, 0
      %p76 = por %p74, %p75
      %p77 = scmp.ne.s32.totalorder %s66, %s69
      %p78 = scmp.eq.s32.totalorder %s19, 1
      %p79 = por %p77, %p78
      %p80 = scmp.ne.s32.totalorder %s69, %s70
      %p81 = scmp.eq.s32.totalorder %s19, 0
      %p82 = por %p80, %p81
      %p83 = scmp.ne.s32.totalorder %s69, %s70
      %p84 = scmp.eq.s32.totalorder %s20, 1
      %p85 = por %p83, %p84
      %p87 = scmp.ne.s32.totalorder %s70, %s86
      %p88 = scmp.eq.s32.totalorder %s20, 0
      %p89 = por %p87, %p88
      %s90 = ssub.s32 %s21, %s33
      %s91 = ssub.s32 %s22, %s29
      %s92 = sor.u32 %s90, %s91
      %p93 = scmp.eq.s32.totalorder %s92, 0
      %s95 = sadd.s32 %s94, 1
      %s96 = scalar_select %p93, %s94, %s95
      %p99 = pneg %p93
      %p100 = scmp.eq.s32.totalorder %s14, 1
      %p101 = por %p99, %p100
      %p102 = scmp.ne.s32.totalorder %s94, %s97
      %p103 = scmp.eq.s32.totalorder %s14, 0
      %p104 = por %p102, %p103
      %p105 = scmp.ne.s32.totalorder %s94, %s97
      %p106 = scmp.eq.s32.totalorder %s19, 1
      %p107 = por %p105, %p106
      %p108 = scmp.ne.s32.totalorder %s97, %s98
      %p109 = scmp.eq.s32.totalorder %s19, 0
      %p110 = por %p108, %p109
      %p111 = scmp.ne.s32.totalorder %s97, %s98
      %p112 = scmp.eq.s32.totalorder %s20, 1
      %p113 = por %p111, %p112
      %p115 = scmp.ne.s32.totalorder %s98, %s114
      %p116 = scmp.eq.s32.totalorder %s20, 0
      %p117 = por %p115, %p116
      %p118 = scmp.le.s32.totalorder 1, %s14
      %p119 = scmp.lt.s32.totalorder %s14, 3
      %p120 = pnand %p118, %p119
      %p121 = pneg %p120
      // Predicated region
      $region9: #{tpu_custom_call.1} parent=5 // pred_check
        _
      $region10: #{tpu_custom_call.1} parent=5 // pred_check_branch
        %123 = sbr.rel (%p120) target = $region12
      $region11: #{tpu_custom_call.1} parent=5 // pred_region
        %s124 = ssub.s32 %s14, 1
      $region12: #{tpu_custom_call.1} parent=5 // pred_fallthru
        _
      %p125 = scmp.lt.s32.totalorder %s14, 2
      // Predicated region
      $region13: #{tpu_custom_call.1} parent=5 // pred_check
        %p126 = pneg %p125
      $region14: #{tpu_custom_call.1} parent=5 // pred_check_branch
        %128 = sbr.rel (%p126) target = $region16
      $region15: #{tpu_custom_call.1} parent=5 // pred_region
        // Predicated region
        $region17: #{tpu_custom_call.1} parent=15 // pred_check
          %p129 = pneg %p48
        $region18: #{tpu_custom_call.1} parent=15 // pred_check_branch
          %131 = sbr.rel (%p129) target = $region20
        $region19: #{tpu_custom_call.1} parent=15 // pred_region
          %s132 = sand.u32 %s38, 1
          %s133 = scalar_lea.sflag [#allocation3], %s132
          %s134 = sand.u32 %s38, 1
          %s135 = smul.addr %s134, 8
          %s136 = scalar_lea.vmem [#allocation2], %s135
          %s137 = smul.u32 2, %s22
          %139 = vsyncadd %s133, 0
          %s140 = smul.addr %s21, 2
          %s141 = sadd.s32 %s137, %s140
          %s142 = smul.addr %s141, 4
          %s143 = scalar_lea.hbm %s0, %s142
          %s145 = sshll.u32 %s143, 4
          %s146 = int_to_ptr.hbm [resolvable:$true] %s145
          %s147 = sshll.u32 %s136, 4
          %s148 = int_to_ptr.vmem [resolvable:$true] %s147
          %150 = dma.hbm_to_vmem [thread:$0]  %s146, 128, %s148, %s133
        $region20: #{tpu_custom_call.1} parent=15 // pred_fallthru
          _
        // Predicated region
        $region21: #{tpu_custom_call.1} parent=15 // pred_check
          %p151 = pneg %p76
        $region22: #{tpu_custom_call.1} parent=15 // pred_check_branch
          %153 = sbr.rel (%p151) target = $region24
        $region23: #{tpu_custom_call.1} parent=15 // pred_region
          %s154 = smul.u32 2, %s22
          %p155 = scmp.lt.s32.totalorder %s21, 1
          %s156 = scalar_select %p155, %s21, 1
          %p157 = scmp.lt.s32.totalorder %s154, 1
          %s158 = scalar_select %p157, %s154, 1
          %s159 = smul.addr %s156, 2
          %s160 = sadd.s32 %s158, %s159
          %s161 = scalar_lea.vmem %s1, %s160
          %s162 = smul.u32 2, %s22
        $region24: #{tpu_custom_call.1} parent=15 // pred_fallthru
          _
      $region16: #{tpu_custom_call.1} parent=5 // pred_fallthru
        _
      %p163 = scmp.le.s32.totalorder 1, %s14
      %p164 = scmp.lt.s32.totalorder %s14, 3
      %p165 = pnand %p163, %p164
      %p166 = pneg %p165
      // Predicated region
      $region25: #{tpu_custom_call.1} parent=5 // pred_check
        _
      $region26: #{tpu_custom_call.1} parent=5 // pred_check_branch
        %168 = sbr.rel (%p165) target = $region28
      $region27: #{tpu_custom_call.1} parent=5 // pred_region
        %s169 = ssub.s32 %s14, 1
        %s170 = sand.u32 %s41, 1
        %s171 = scalar_lea.sflag [#allocation3], %s170
        %s172 = sand.u32 %s41, 1
        %s173 = smul.addr %s172, 8
        %s174 = scalar_lea.vmem [#allocation2], %s173
        // Predicated region
        $region29: #{tpu_custom_call.1} parent=27 // pred_check
          %p175 = pneg %p54
        $region30: #{tpu_custom_call.1} parent=27 // pred_check_branch
          %177 = sbr.rel (%p175) target = $region32
        $region31: #{tpu_custom_call.1} parent=27 // pred_region
          %179 = dma.done %s171, 128
        $region32: #{tpu_custom_call.1} parent=27 // pred_fallthru
          _
        %s180 = sand.u32 %s41, 1
        %s181 = scalar_lea.sflag [#allocation3], %s180
        %s182 = sand.u32 %s41, 1
        %s183 = smul.addr %s182, 8
        %s184 = scalar_lea.vmem [#allocation2], %s183
        %p185 = pneg %p54
        %p186 = pneg %p51
        %s187 = smul.u32 2, %s24
        %p188 = scmp.lt.s32.totalorder %s23, 1
        %s189 = scalar_select %p188, %s23, 1
        %p190 = scmp.lt.s32.totalorder %s187, 1
        %s191 = scalar_select %p190, %s187, 1
        %s192 = smul.addr %s189, 2
        %s193 = sadd.s32 %s191, %s192
        %s194 = scalar_lea.vmem %s1, %s193
        %p195 = pneg %p82
        %p196 = pneg %p79
        %p197 = pneg %p110
        %p198 = pneg %p107
        %s199 = sand.u32 %s97, 1
        %s200 = scalar_lea.sflag [#allocation4], %s199
        %s201 = sand.u32 %s97, 1
        %s202 = scalar_lea.vmem [#allocation5], %s201
        %s203 = smul.u32 2, %s24
        %s204 = smul.u32 2, %s24
        %p205 = scmp.lt.s32.totalorder %s23, 1
        %s206 = scalar_select %p205, %s23, 1
        %p207 = scmp.lt.s32.totalorder %s204, 1
        %s208 = scalar_select %p207, %s204, 1
        %s209 = smul.addr %s206, 2
        %s210 = sadd.s32 %s208, %s209
        %s211 = scalar_lea.vmem %s1, %s210
        %s212 = smul.u32 2, %s24
        %v213 = vld [vmem:[%s174] sm:$0xff]
        %v214 = vld [vmem:[%s211] sm:$0x3]
        %v215 = vunpack.c.0.s8 %v214
        %v216 = vand.u32 %v215, 255
        %218 = vst [vmem:[#allocation1] ss:$2 sm:$0xff] %v213
        %v219 = vld.sshfl [vmem:[#allocation1] sm:$0xff pattern:$0x75316420]
        %v220 = vld.sshfl [vmem:[#allocation1 + $0x8] sm:$0xff pattern:$0x75316420]
        %vm223 = vcmask 1043456
        %v224 = vsel %vm223, %v219, -inf
        %v225 = vrot.slane %v224, 4
        %v226 = vmax.f32 %v224, %v225
        %v227 = vrot.slane %v226, 2
        %v228 = vmax.f32 %v226, %v227
        %v229 = vrot.slane %v228, 1
        %v230 = vmax.f32 %v228, %v229
        %v231 = vsel %vm223, %v220, -inf
        %v232 = vrot.slane %v231, 4
        %v233 = vmax.f32 %v231, %v232
        %v234 = vrot.slane %v233, 2
        %v235 = vmax.f32 %v233, %v234
        %v236 = vrot.slane %v235, 1
        %v237 = vmax.f32 %v235, %v236
        %v240 = vrot.slane %v237, 4
        %v241 = vsel %vm223, %v230, %v240
        %v243 = vsub.f32 %v213, %v241
        %v244 = vmul.f32 %v243, 1.442695
        %v245 = vpow.pop %v244
        %247 = vst [vmem:[#allocation1] ss:$2 sm:$0xff] %v245
        %v248 = vld.sshfl [vmem:[#allocation1] sm:$0xff pattern:$0x75316420]
        %v249 = vld.sshfl [vmem:[#allocation1 + $0x8] sm:$0xff pattern:$0x75316420]
        %v252 = vsel %vm223, %v248, 0.0
        %v253 = vrot.slane %v252, 4
        %v254 = vadd.f32 %v252, %v253
        %v255 = vrot.slane %v254, 2
        %v256 = vadd.f32 %v254, %v255
        %v257 = vrot.slane %v256, 1
        %v258 = vadd.f32 %v256, %v257
        %v259 = vsel %vm223, %v249, 0.0
        %v260 = vrot.slane %v259, 4
        %v261 = vadd.f32 %v259, %v260
        %v262 = vrot.slane %v261, 2
        %v263 = vadd.f32 %v261, %v262
        %v264 = vrot.slane %v263, 1
        %v265 = vadd.f32 %v263, %v264
        %v266 = vlog2.pop %v258
        %v267 = vmul.f32 %v266, 0.6931472
        %v268 = vlog2.pop %v265
        %v269 = vmul.f32 %v268, 0.6931472
        %v270 = vadd.f32 %v267, %v230
        %v271 = vadd.f32 %v269, %v237
        %v272 = vlaneseq
        %v273 = vshrl.u32 %v272, 7
        %v274 = vperm.slane %v216, 0
        %v275 = vperm.slane %v216, 4
        %v276 = vperm.slane %v274, 0
        %v277 = vperm.slane %v275, 0
        %vm278 = vcmp.eq.s32.totalorder %v273, %v276
        %vm279 = vcmp.eq.s32.totalorder %v273, %v277
        %280 = vst [vmem:[#allocation1] ss:$2 sm:$0xff] %v213
        %v281 = vld.sshfl [vmem:[#allocation1] sm:$0xff pattern:$0x75316420]
        %v282 = vld.sshfl [vmem:[#allocation1 + $0x8] sm:$0xff pattern:$0x75316420]
        %v285 = vsel %vm278, %v281, 0.0
        %v286 = vsel %vm279, %v282, 0.0
        %v287 = vsel %vm223, %v285, 0.0
        %v288 = vrot.slane %v287, 4
        %v289 = vadd.f32 %v287, %v288
        %v290 = vrot.slane %v289, 2
        %v291 = vadd.f32 %v289, %v290
        %v292 = vrot.slane %v291, 1
        %v293 = vadd.f32 %v291, %v292
        %v294 = vsel %vm223, %v286, 0.0
        %v295 = vrot.slane %v294, 4
        %v296 = vadd.f32 %v294, %v295
        %v297 = vrot.slane %v296, 2
        %v298 = vadd.f32 %v296, %v297
        %v299 = vrot.slane %v298, 1
        %v300 = vadd.f32 %v298, %v299
        %v301 = vsub.f32 %v270, %v293
        %v302 = vsub.f32 %v271, %v300
        %v303 = vlaneseq
        %v304 = vand.u32 %v303, 127
        %v305 = vadd.s32 %v304, 128
        %s306 = smul.u32 %s24, 256
        %v307 = vstv %s306
        %v308 = vadd.s32 %v307, %v304
        %v309 = vadd.s32 %v307, %v305
        %vm310 = vcmp.lt.s32.totalorder %v308, 256
        %vm311 = vcmp.lt.s32.totalorder %v309, 256
        %vm312 = vcmp.ne.s32.totalorder %v216, 255
        %v313 = vsel %vm310, 1, 0
        %v314 = vsel %vm311, 1, 0
        %v315 = vrot.slane %v314, 4
        %v316 = vsel %vm223, %v313, %v315
        %vm317 = vcmp.ne.s32.totalorder %v316, 0
        %vm318 = vmand %vm312, %vm317
        %v321 = vrot.slane %v302, 4
        %v322 = vsel %vm223, %v301, %v321
        %v324 = vsel %vm318, %v322, 0.0
        %v326 = vperm.slane %v324, 0
        %v327 = vperm.slane %v324, 4
        %vm330 = vcmask 1040384
        %v331 = vsel %vm330, %v326, 0.0
        %v332 = vsel %vm330, %v327, 0.0
        %v333 = vadd.f32 %v331, %v332
        %334 = vadd.xlane.f32.xlu0 %v333
        %v335 = vpop.xlane.xlu0 %334
        %v336 = vrot.slane %v335, 4
        %v337 = vadd.f32 %v335, %v336
        %v338 = vrot.slane %v337, 2
        %v339 = vadd.f32 %v337, %v338
        %v340 = vrot.slane %v339, 1
        %v341 = vadd.f32 %v339, %v340
        %s342 = vtos %v341
        %v343 = vsel %vm318, 1, 0
        %v344 = vcvt.s32.f32 %v343
        %v346 = vperm.slane %v344, 0
        %v347 = vperm.slane %v344, 4
        %v350 = vsel %vm330, %v346, 0.0
        %v351 = vsel %vm330, %v347, 0.0
        %v352 = vadd.f32 %v350, %v351
        %353 = vadd.xlane.f32.xlu0 %v352
        %v354 = vpop.xlane.xlu0 %353
        %v355 = vrot.slane %v354, 4
        %v356 = vadd.f32 %v354, %v355
        %v357 = vrot.slane %v356, 2
        %v358 = vadd.f32 %v356, %v357
        %v359 = vrot.slane %v358, 1
        %v360 = vadd.f32 %v358, %v359
        %s361 = vtos %v360
        %vm362 = vcmp.eq.s32.totalorder %v304, 0
        %v363 = vstv %s342
        %v364 = vstv %s361
        %v365 = vsel %vm362, %v363, %v364
        %vm366 = vcmask 8192
        %367 = vst.msk [vmem:[%s202] sm:$0x1] %vm366, %v365
        %s368 = sand.u32 %s97, 1
        %s369 = scalar_lea.sflag [#allocation4], %s368
        %s370 = sand.u32 %s97, 1
        %s371 = scalar_lea.vmem [#allocation5], %s370
        // Predicated region
        $region33: #{tpu_custom_call.1} parent=27 // pred_check
          %p372 = pneg %p107
        $region34: #{tpu_custom_call.1} parent=27 // pred_check_branch
          %374 = sbr.rel (%p372) target = $region36
        $region35: #{tpu_custom_call.1} parent=27 // pred_region
          %376 = vsyncadd %s369, 0
          %s377 = sadd.s32 %s24, %s23
          %s378 = scalar_lea.hbm %s2, %s377
          %s380 = sshll.u32 %s371, 4
          %s381 = int_to_ptr.vmem [resolvable:$true] %s380
          %s382 = sshll.u32 %s378, 4
          %s383 = int_to_ptr.hbm [resolvable:$true] %s382
          %385 = dma.vmem_to_hbm [thread:$0]  %s381, 16, %s383, %s369
        $region36: #{tpu_custom_call.1} parent=27 // pred_fallthru
          _
      $region28: #{tpu_custom_call.1} parent=5 // pred_fallthru
        _
      %p386 = scmp.le.s32.totalorder 2, %s14
      // Predicated region
      $region37: #{tpu_custom_call.1} parent=5 // pred_check
        %p387 = pneg %p386
      $region38: #{tpu_custom_call.1} parent=5 // pred_check_branch
        %389 = sbr.rel (%p387) target = $region40
      $region39: #{tpu_custom_call.1} parent=5 // pred_region
        %s390 = ssub.s32 %s14, 2
        // Predicated region
        $region41: #{tpu_custom_call.1} parent=39 // pred_check
          %p391 = pneg %p113
        $region42: #{tpu_custom_call.1} parent=39 // pred_check_branch
          %393 = sbr.rel (%p391) target = $region44
        $region43: #{tpu_custom_call.1} parent=39 // pred_region
          %s394 = sand.u32 %s98, 1
          %s395 = scalar_lea.sflag [#allocation4], %s394
          %s396 = sand.u32 %s98, 1
          %s397 = scalar_lea.vmem [#allocation5], %s396
          %399 = dma.done %s395, 16
        $region44: #{tpu_custom_call.1} parent=39 // pred_fallthru
          _
      $region40: #{tpu_custom_call.1} parent=5 // pred_fallthru
        _
    $region6: #{tpu_custom_call.1} parent=1 // loop_footer
      %s18 = sadd.s32 1, %s14
    $region7: #{tpu_custom_call.1} parent=1 // loop_footer_branch
      %13 = sbr.rel target = $region3
    $region8: #{tpu_custom_call.1} parent=1 // loop_exit
      _
    %400 = vsyncpa [#allocation3], 1
    %s401 = scalar_lea.sflag [#allocation3], 1
    %402 = vsyncpa %s401, 1
    %403 = vsyncpa [#allocation4], 1
    %s404 = scalar_lea.sflag [#allocation4], 1
    %405 = vsyncpa %s404, 1

</llo_original>
